<compile_context>
chip_gen: v6e
topology: v6e:2x2x1
jax: 0.10.0
libtpu: 0.0.40
codegen_flags: <defaults>
</compile_context>

<pallas_src>
import functools

import jax
import jax.numpy as jnp
from jax import lax
from jax.experimental import pallas as pl
from jax.experimental.pallas import tpu as pltpu


def _self_attention_kernel(x_ref, w_ref, b_ref, gamma_ref, o_ref, *, cq_pad):
    # x_ref: (1, C, N) f32 | w_ref: (Ctot, C) bf16 | b_ref: (Ctot, 1) f32
    # gamma_ref: (1,) f32 in SMEM | o_ref: (1, C, N)
    x = x_ref[0]                                                    # (C, N) f32

    # Fused 1x1-conv projections: single MXU matmul, f32 accumulation.
    qkv = jnp.dot(w_ref[...], x.astype(jnp.bfloat16),
                  preferred_element_type=jnp.float32) + b_ref[...]  # (Ctot, N)

    q = qkv[:cq_pad].astype(jnp.bfloat16)           # (Cq_pad, N), pad rows = 0
    k = qkv[cq_pad:2 * cq_pad].astype(jnp.bfloat16)  # (Cq_pad, N), pad rows = 0
    v = qkv[2 * cq_pad:].astype(jnp.bfloat16)        # (C, N)

    # energy[i, j] = sum_c q[c, i] * k[c, j]  (== bmm(proj_query, proj_key)).
    # Contract the channel (sublane) axes of both operands -> no explicit
    # transpose; zero-padded channels contribute 0.
    energy = lax.dot_general(q, k, (((0,), (0,)), ((), ())),
                             preferred_element_type=jnp.float32)    # (N, N) f32

    # Numerically stable softmax over the last dim; reciprocal on the EUP.
    m = jnp.max(energy, axis=-1, keepdims=True)
    p = jnp.exp(energy - m)
    inv = pl.reciprocal(jnp.sum(p, axis=-1, keepdims=True), approx=True)
    attn = (p * inv).astype(jnp.bfloat16)                           # (N, N)

    # out[c, i] = sum_j v[c, j] * attn[i, j]  (== bmm(value, attn^T)):
    # contract the lane axes of both operands -> no explicit transpose, and
    # the result is (C, N), i.e. lane-dense over N for the store.
    out = lax.dot_general(v, attn, (((1,), (1,)), ((), ())),
                          preferred_element_type=jnp.float32)       # (C, N)

    o_ref[0] = (gamma_ref[0] * out + x).astype(o_ref.dtype)


def self_attention(x_nchw, wq, bq, wk, bk, wv, bv, gamma):
    """x_nchw: (B, C, H, W); wq/wk: (Cq, C); wv: (C, C); biases 1-D; gamma: (1,)."""
    B, C, H, W = x_nchw.shape
    N = H * W
    Cq = wq.shape[0]
    Cq_pad = max(8, -(-Cq // 8) * 8)         # sublane-align the q/k slices
    Ctot = 2 * Cq_pad + C

    # NCHW -> (B, C, N): a free reshape, no transpose (channels-major kept).
    x_bcn = x_nchw.reshape(B, C, N)

    # Fused, padded QKV weight / bias (padded rows are zero -> no effect on
    # the energy matmul). Weights cast to bf16 for the MXU.
    f32 = jnp.float32
    w_all = jnp.zeros((Ctot, C), f32)
    w_all = w_all.at[:Cq].set(wq.astype(f32))
    w_all = w_all.at[Cq_pad:Cq_pad + Cq].set(wk.astype(f32))
    w_all = w_all.at[2 * Cq_pad:].set(wv.astype(f32))
    w_all = w_all.astype(jnp.bfloat16)
    b_all = jnp.zeros((Ctot,), f32)
    b_all = b_all.at[:Cq].set(bq.astype(f32))
    b_all = b_all.at[Cq_pad:Cq_pad + Cq].set(bk.astype(f32))
    b_all = b_all.at[2 * Cq_pad:].set(bv.astype(f32))
    b_all = b_all.reshape(Ctot, 1)

    # Scoped-VMEM sized to the per-step live set (with headroom), clamped to
    # what every TPU generation (incl. v7x's 64 MiB/TC) can provide.
    live = (4 * C * N * 4                 # x + out blocks, double-buffered
            + 2 * Ctot * C * 2            # fused weight copies
            + Ctot * N * 4                # qkv
            + 3 * N * N * 4               # energy / p / attn (+ slack)
            + 4 * C * N * 4)              # casts + epilogue slack
    vmem_limit = int(min(max(3 * live, 32 * 1024 * 1024), 64 * 1024 * 1024))

    kernel = functools.partial(_self_attention_kernel, cq_pad=Cq_pad)

    out_bcn = pl.pallas_call(
        kernel,
        out_shape=jax.ShapeDtypeStruct((B, C, N), x_nchw.dtype),
        grid=(B,),
        in_specs=[
            pl.BlockSpec((1, C, N), lambda b: (b, 0, 0)),           # x
            pl.BlockSpec((Ctot, C), lambda b: (0, 0)),              # fused W (bf16)
            pl.BlockSpec((Ctot, 1), lambda b: (0, 0)),              # fused bias
            pl.BlockSpec(memory_space=pltpu.MemorySpace.SMEM),      # gamma scalar
        ],
        out_specs=pl.BlockSpec((1, C, N), lambda b: (b, 0, 0)),
        compiler_params=pltpu.CompilerParams(
            dimension_semantics=("parallel",),
            vmem_limit_bytes=vmem_limit,
        ),
    )(x_bcn, w_all, b_all, gamma)

    return out_bcn.reshape(B, C, H, W)


def reference(x, wq, bq, wk, bk, wv, bv, gamma):
    """Pure-JAX f32 transcription of the PyTorch forward (NCHW)."""
    B, C, H, W = x.shape
    N = H * W
    xf = x.reshape(B, C, N)
    q = jnp.einsum('oc,bcn->bon', wq, xf) + bq[:, None]             # (B, Cq, N)
    k = jnp.einsum('oc,bcn->bon', wk, xf) + bk[:, None]             # (B, Cq, N)
    v = jnp.einsum('oc,bcn->bon', wv, xf) + bv[:, None]             # (B, C, N)
    energy = jnp.einsum('bcn,bcm->bnm', q, k)                       # (B, N, N)
    attn = jax.nn.softmax(energy, axis=-1)
    out = jnp.einsum('bcm,bnm->bcn', v, attn)                       # (B, C, N)
    out = out.reshape(B, C, H, W)
    return gamma[0] * out + x


if __name__ == "__main__":
    # Small shapes consistent with the module (in_dim must be >= 8).
    # N = H*W = 256 keeps the output store lane-dense (multiple of 128).
    B, C, H, W = 2, 32, 16, 16
    Cq = C // 8

    key = jax.random.PRNGKey(0)
    kx, kq, kbq, kk, kbk, kv, kbv = jax.random.split(key, 7)

    x = jax.random.normal(kx, (B, C, H, W), dtype=jnp.float32)
    # Conv2d(kernel_size=1) weights, (out_channels, in_channels); biases 1-D.
    wq = 0.1 * jax.random.normal(kq, (Cq, C), dtype=jnp.float32)
    bq = 0.1 * jax.random.normal(kbq, (Cq,), dtype=jnp.float32)
    wk = 0.1 * jax.random.normal(kk, (Cq, C), dtype=jnp.float32)
    bk = 0.1 * jax.random.normal(kbk, (Cq,), dtype=jnp.float32)
    wv = 0.1 * jax.random.normal(kv, (C, C), dtype=jnp.float32)
    bv = 0.1 * jax.random.normal(kbv, (C,), dtype=jnp.float32)

    # Module-faithful init: gamma starts at zero (output == x); also check a
    # nonzero gamma so the attention path is exercised numerically.
    gamma_init = jnp.zeros((1,), dtype=jnp.float32)
    gamma_test = jnp.array([0.7], dtype=jnp.float32)

    ok = True
    for gamma in (gamma_init, gamma_test):
        out = jax.block_until_ready(self_attention(x, wq, bq, wk, bk, wv, bv, gamma))
        ref = reference(x, wq, bq, wk, bk, wv, bv, gamma)
        # bf16 MXU operands + approx reciprocal -> slightly looser tolerance
        # than the pure-f32 version.
        ok = ok and bool(jnp.allclose(out, ref, atol=2e-2, rtol=2e-2))

    print("KERNEL_OK" if ok else "KERNEL_MISMATCH")
</pallas_src>

<mosaic_0001>
module attributes {stable_mosaic.version = 11 : i64} {
  func.func @_self_attention_kernel(%arg0: i32, %arg1: memref<1x32x256xf32, #tpu.memory_space<vmem>>, %arg2: memref<48x32xbf16, #tpu.memory_space<vmem>>, %arg3: memref<48x1xf32, #tpu.memory_space<vmem>>, %arg4: memref<1xf32, #tpu.memory_space<smem>>, %arg5: memref<1x32x256xf32, #tpu.memory_space<vmem>>) attributes {dimension_semantics = [#tpu.dimension_semantics<parallel>], iteration_bounds = array<i64: 2>, scalar_prefetch = 0 : i64, scratch_operands = 0 : i64, tpu.core_type = #tpu.core_type<tc>, window_params = [{transform_indices = @transform_0, window_bounds = array<i64: 1, 32, 256>}, {pipeline_mode = #tpu.pipeline_mode<synchronous>, transform_indices = @transform_1, window_bounds = array<i64: 48, 32>}, {pipeline_mode = #tpu.pipeline_mode<synchronous>, transform_indices = @transform_2, window_bounds = array<i64: 48, 1>}, {transform_indices = @transform_3, window_bounds = array<i64: 1>}, {transform_indices = @transform_4, window_bounds = array<i64: 1, 32, 256>}]} {
    %c0 = arith.constant 0 : index
    %c0_0 = arith.constant 0 : index
    %c0_1 = arith.constant 0 : index
    %0 = vector.load %arg1[%c0, %c0_0, %c0_1] : memref<1x32x256xf32, #tpu.memory_space<vmem>>, vector<1x32x256xf32>
    %1 = vector.shape_cast %0 : vector<1x32x256xf32> to vector<32x256xf32>
    %c0_2 = arith.constant 0 : index
    %c0_3 = arith.constant 0 : index
    %2 = vector.load %arg2[%c0_2, %c0_3] : memref<48x32xbf16, #tpu.memory_space<vmem>>, vector<48x32xbf16>
    %3 = arith.truncf %1 : vector<32x256xf32> to vector<32x256xbf16>
    %cst = arith.constant dense<0.000000e+00> : vector<48x256xf32>
    %4 = tpu.matmul %2, %3, %cst {dimension_numbers = #tpu.dot_dimension_numbers<[1], [0], [0], [1], [0, 0, 1, 1], [], []>} : vector<48x32xbf16>, vector<32x256xbf16>, vector<48x256xf32> -> vector<48x256xf32>
    %c0_4 = arith.constant 0 : index
    %c0_5 = arith.constant 0 : index
    %5 = vector.load %arg3[%c0_4, %c0_5] : memref<48x1xf32, #tpu.memory_space<vmem>>, vector<48x1xf32>
    %6 = vector.broadcast %5 : vector<48x1xf32> to vector<48x256xf32>
    %7 = arith.addf %4, %6 : vector<48x256xf32>
    %8 = vector.extract_strided_slice %7 {offsets = [0, 0], sizes = [8, 256], strides = [1, 1]} : vector<48x256xf32> to vector<8x256xf32>
    %9 = arith.truncf %8 : vector<8x256xf32> to vector<8x256xbf16>
    %10 = vector.extract_strided_slice %7 {offsets = [8, 0], sizes = [8, 256], strides = [1, 1]} : vector<48x256xf32> to vector<8x256xf32>
    %11 = arith.truncf %10 : vector<8x256xf32> to vector<8x256xbf16>
    %12 = vector.extract_strided_slice %7 {offsets = [16, 0], sizes = [32, 256], strides = [1, 1]} : vector<48x256xf32> to vector<32x256xf32>
    %13 = arith.truncf %12 : vector<32x256xf32> to vector<32x256xbf16>
    %cst_6 = arith.constant dense<0.000000e+00> : vector<256x256xf32>
    %14 = tpu.matmul %9, %11, %cst_6 {dimension_numbers = #tpu.dot_dimension_numbers<[0], [0], [1], [1], [0, 1, 1, 1], [], []>} : vector<8x256xbf16>, vector<8x256xbf16>, vector<256x256xf32> -> vector<256x256xf32>
    %cst_7 = arith.constant dense<0xFF800000> : vector<256xf32>
    %15 = vector.multi_reduction <maximumf>, %14, %cst_7 [1] : vector<256x256xf32> to vector<256xf32>
    %16 = vector.shape_cast %15 : vector<256xf32> to vector<256x1xf32>
    %17 = vector.broadcast %16 : vector<256x1xf32> to vector<256x256xf32>
    %18 = arith.subf %14, %17 : vector<256x256xf32>
    %19 = math.exp %18 : vector<256x256xf32>
    %cst_8 = arith.constant dense<0.000000e+00> : vector<256xf32>
    %20 = vector.multi_reduction <add>, %19, %cst_8 [1] : vector<256x256xf32> to vector<256xf32>
    %21 = vector.shape_cast %20 : vector<256xf32> to vector<256x1xf32>
    %22 = tpu.reciprocal %21 {approx = true} : vector<256x1xf32> -> vector<256x1xf32>
    %23 = vector.broadcast %22 : vector<256x1xf32> to vector<256x256xf32>
    %24 = arith.mulf %19, %23 : vector<256x256xf32>
    %25 = arith.truncf %24 : vector<256x256xf32> to vector<256x256xbf16>
    %cst_9 = arith.constant dense<0.000000e+00> : vector<32x256xf32>
    %26 = tpu.matmul %13, %25, %cst_9 {dimension_numbers = #tpu.dot_dimension_numbers<[1], [1], [0], [0], [0, 0, 1, 0], [], []>} : vector<32x256xbf16>, vector<256x256xbf16>, vector<32x256xf32> -> vector<32x256xf32>
    %c0_10 = arith.constant 0 : index
    %27 = memref.load %arg4[%c0_10] : memref<1xf32, #tpu.memory_space<smem>>
    %28 = vector.broadcast %27 : f32 to vector<32x256xf32>
    %29 = arith.mulf %28, %26 : vector<32x256xf32>
    %30 = arith.addf %29, %1 : vector<32x256xf32>
    %c0_11 = arith.constant 0 : index
    %c0_12 = arith.constant 0 : index
    %c0_13 = arith.constant 0 : index
    %31 = vector.load %arg5[%c0_11, %c0_12, %c0_13] : memref<1x32x256xf32, #tpu.memory_space<vmem>>, vector<1x32x256xf32>
    %32 = vector.shape_cast %31 : vector<1x32x256xf32> to vector<32x256xf32>
    %33 = vector.shape_cast %30 : vector<32x256xf32> to vector<1x32x256xf32>
    tpu.vector_store %arg5[%c0_11, %c0_12, %c0_13], %33 {strides = array<i32>} : memref<1x32x256xf32, #tpu.memory_space<vmem>>, vector<1x32x256xf32>,
    return
  }
  func.func @transform_0(%arg0: i32) -> (i32, i32, i32) {
    %c0_i32 = arith.constant 0 : i32
    %c0_i32_0 = arith.constant 0 : i32
    %c0_i32_1 = arith.constant 0 : i32
    return %arg0, %c0_i32, %c0_i32_0 : i32, i32, i32
  }
  func.func @transform_1(%arg0: i32) -> (i32, i32) {
    %c0_i32 = arith.constant 0 : i32
    %c0_i32_0 = arith.constant 0 : i32
    %c0_i32_1 = arith.constant 0 : i32
    return %c0_i32, %c0_i32_0 : i32, i32
  }
  func.func @transform_2(%arg0: i32) -> (i32, i32) {
    %c0_i32 = arith.constant 0 : i32
    %c0_i32_0 = arith.constant 0 : i32
    %c0_i32_1 = arith.constant 0 : i32
    return %c0_i32, %c0_i32_0 : i32, i32
  }
  func.func @transform_3(%arg0: i32) -> i32 {
    %c0_i32 = arith.constant 0 : i32
    %c0_i32_0 = arith.constant 0 : i32
    return %c0_i32 : i32
  }
  func.func @transform_4(%arg0: i32) -> (i32, i32, i32) {
    %c0_i32 = arith.constant 0 : i32
    %c0_i32_0 = arith.constant 0 : i32
    %c0_i32_1 = arith.constant 0 : i32
    return %arg0, %c0_i32, %c0_i32_0 : i32, i32, i32
  }
}

</mosaic_0001>

<llo_original>
// kernel: tpu_custom_call.1
$region0: #{tpu_custom_call.1}
  #allocation0 [shape = 'u32[]', space=smem, size = 0x4, offset = 0x4, fixed_abs, tag = 'smem constant byte address 0x4 - core index']
  #allocation1 [shape = 'u32[144,128]{1,0:T(1,128)}', space=vmem, size = 0x12000, scoped, tag = 'internal scratch']
  #allocation2 [shape = 'f32[1]{0:T(128)S(6)}', space=smem, size = 0x200, scoped, tag = 'scoped memory for tpu_custom_call.1']
  %s0 = inlined_call_operand.hbm [shape: f32[2,32,256], index: 0, kind: input, shape index: {}]
  %s1 = inlined_call_operand.vmem [shape: bf16[48,32], index: 1, kind: input, shape index: {}]
  %s2 = inlined_call_operand.vmem [shape: f32[48,1], index: 2, kind: input, shape index: {}]
  %s3 = inlined_call_operand.<no memory space> [shape: f32[1], index: 3, kind: input, shape index: {}]
  %s4 = inlined_call_operand.hbm [shape: f32[2,32,256], index: 4, kind: output, shape index: {}]
  %s5 = sld [smem:[#allocation0]]
  $region53: #{tpu_custom_call.1} parent=0
    _
  %s7 = ssub.s32 1, %s5
  %s8 = scalar_select 0, %s7, %s5
  %9 = sst [smem:[#allocation2]] %s3
  $region1: #{tpu_custom_call.1} parent=0
    #allocation3 [shape = 'u8[65536]{0}', space=vmem, size = 0x10000, scoped, tag = 'input window, operand 0']
    #allocation4 [shape = 's32[2]{0}', space=sflag, size = 0x8, scoped, tag = 'scoped memory for tpu_custom_call.1']
    #allocation5 [shape = 's32[2]{0}', space=sflag, size = 0x8, scoped, tag = 'scoped memory for tpu_custom_call.1']
    #allocation6 [shape = 'u8[65536]{0}', space=vmem, size = 0x10000, scoped, tag = 'output window, operand 0']
    %10 = vsyncpa [#allocation4], 0
    %s11 = scalar_lea.sflag [#allocation4], 1
    %12 = vsyncpa %s11, 0
    %13 = vsyncpa [#allocation5], 0
    %s14 = scalar_lea.sflag [#allocation5], 1
    %15 = vsyncpa %s14, 0
    loop: start=0, step=1, limit=4
    $region2: #{tpu_custom_call.1} parent=1 // loop_pre_header
      _
    $region3: #{tpu_custom_call.1} parent=1 // loop_header
      %s17 = sphi 0, %s21
      %p18 = scmp.ge.s32.totalorder %s17, 4
      %s27 = sphi 0, %s29
      %s30 = sphi 0, %s27
      %s31 = sphi 0, %s30
      %s47 = sphi 0, %s31
      %s51 = sphi 0, %s51
      %s53 = sphi 0, %s51
      %s54 = sphi 0, %s53
      %s68 = sphi 0, %s54
      %s72 = sphi 0, %s72
      %s74 = sphi 0, %s72
      %s75 = sphi 0, %s74
      %s89 = sphi 0, %s75
      %s93 = sphi 0, %s93
      %s95 = sphi 0, %s93
      %s96 = sphi 0, %s95
      %s110 = sphi 0, %s96
      %s116 = sphi 0, %s118
      %s119 = sphi 0, %s116
      %s120 = sphi 0, %s119
      %s136 = sphi 0, %s120
    $region4: #{tpu_custom_call.1} parent=1 // loop_header_branch
      %20 = sbr.rel (%p18) target = $region8
    $region5: #{tpu_custom_call.1} parent=1 // loop_body
      %s22 = ssub.s32 %s17, 1
      %s23 = ssub.s32 %s17, 2
      %s24 = sadd.s32 %s17, 1
      %s25 = ssub.s32 %s17, %s24
      %p26 = scmp.eq.s32.totalorder %s25, 0
      %s28 = sadd.s32 %s27, 1
      %s29 = scalar_select %p26, %s27, %s28
      %p32 = pneg %p26
      %p33 = scmp.eq.s32.totalorder %s17, 1
      %p34 = por %p32, %p33
      %p35 = scmp.ne.s32.totalorder %s27, %s30
      %p36 = scmp.eq.s32.totalorder %s17, 0
      %p37 = por %p35, %p36
      %p38 = scmp.ne.s32.totalorder %s27, %s30
      %p39 = scmp.eq.s32.totalorder %s22, 1
      %p40 = por %p38, %p39
      %p41 = scmp.ne.s32.totalorder %s30, %s31
      %p42 = scmp.eq.s32.totalorder %s22, 0
      %p43 = por %p41, %p42
      %p44 = scmp.ne.s32.totalorder %s30, %s31
      %p45 = scmp.eq.s32.totalorder %s23, 1
      %p46 = por %p44, %p45
      %p48 = scmp.ne.s32.totalorder %s31, %s47
      %p49 = scmp.eq.s32.totalorder %s23, 0
      %p50 = por %p48, %p49
      %s52 = sadd.s32 %s51, 1
      %p55 = scmp.eq.s32.totalorder %s17, 1
      %p56 = scmp.ne.s32.totalorder %s51, %s53
      %p57 = scmp.eq.s32.totalorder %s17, 0
      %p58 = por %p56, %p57
      %p59 = scmp.ne.s32.totalorder %s51, %s53
      %p60 = scmp.eq.s32.totalorder %s22, 1
      %p61 = por %p59, %p60
      %p62 = scmp.ne.s32.totalorder %s53, %s54
      %p63 = scmp.eq.s32.totalorder %s22, 0
      %p64 = por %p62, %p63
      %p65 = scmp.ne.s32.totalorder %s53, %s54
      %p66 = scmp.eq.s32.totalorder %s23, 1
      %p67 = por %p65, %p66
      %p69 = scmp.ne.s32.totalorder %s54, %s68
      %p70 = scmp.eq.s32.totalorder %s23, 0
      %p71 = por %p69, %p70
      %s73 = sadd.s32 %s72, 1
      %p76 = scmp.eq.s32.totalorder %s17, 1
      %p77 = scmp.ne.s32.totalorder %s72, %s74
      %p78 = scmp.eq.s32.totalorder %s17, 0
      %p79 = por %p77, %p78
      %p80 = scmp.ne.s32.totalorder %s72, %s74
      %p81 = scmp.eq.s32.totalorder %s22, 1
      %p82 = por %p80, %p81
      %p83 = scmp.ne.s32.totalorder %s74, %s75
      %p84 = scmp.eq.s32.totalorder %s22, 0
      %p85 = por %p83, %p84
      %p86 = scmp.ne.s32.totalorder %s74, %s75
      %p87 = scmp.eq.s32.totalorder %s23, 1
      %p88 = por %p86, %p87
      %p90 = scmp.ne.s32.totalorder %s75, %s89
      %p91 = scmp.eq.s32.totalorder %s23, 0
      %p92 = por %p90, %p91
      %s94 = sadd.s32 %s93, 1
      %p97 = scmp.eq.s32.totalorder %s17, 1
      %p98 = scmp.ne.s32.totalorder %s93, %s95
      %p99 = scmp.eq.s32.totalorder %s17, 0
      %p100 = por %p98, %p99
      %p101 = scmp.ne.s32.totalorder %s93, %s95
      %p102 = scmp.eq.s32.totalorder %s22, 1
      %p103 = por %p101, %p102
      %p104 = scmp.ne.s32.totalorder %s95, %s96
      %p105 = scmp.eq.s32.totalorder %s22, 0
      %p106 = por %p104, %p105
      %p107 = scmp.ne.s32.totalorder %s95, %s96
      %p108 = scmp.eq.s32.totalorder %s23, 1
      %p109 = por %p107, %p108
      %p111 = scmp.ne.s32.totalorder %s96, %s110
      %p112 = scmp.eq.s32.totalorder %s23, 0
      %p113 = por %p111, %p112
      %s114 = ssub.s32 %s17, %s24
      %p115 = scmp.eq.s32.totalorder %s114, 0
      %s117 = sadd.s32 %s116, 1
      %s118 = scalar_select %p115, %s116, %s117
      %p121 = pneg %p115
      %p122 = scmp.eq.s32.totalorder %s17, 1
      %p123 = por %p121, %p122
      %p124 = scmp.ne.s32.totalorder %s116, %s119
      %p125 = scmp.eq.s32.totalorder %s17, 0
      %p126 = por %p124, %p125
      %p127 = scmp.ne.s32.totalorder %s116, %s119
      %p128 = scmp.eq.s32.totalorder %s22, 1
      %p129 = por %p127, %p128
      %p130 = scmp.ne.s32.totalorder %s119, %s120
      %p131 = scmp.eq.s32.totalorder %s22, 0
      %p132 = por %p130, %p131
      %p133 = scmp.ne.s32.totalorder %s119, %s120
      %p134 = scmp.eq.s32.totalorder %s23, 1
      %p135 = por %p133, %p134
      %p137 = scmp.ne.s32.totalorder %s120, %s136
      %p138 = scmp.eq.s32.totalorder %s23, 0
      %p139 = por %p137, %p138
      %p140 = scmp.le.s32.totalorder 1, %s17
      %p141 = scmp.lt.s32.totalorder %s17, 3
      %p142 = pnand %p140, %p141
      %p143 = pneg %p142
      // Predicated region
      $region9: #{tpu_custom_call.1} parent=5 // pred_check
        _
      $region10: #{tpu_custom_call.1} parent=5 // pred_check_branch
        %145 = sbr.rel (%p142) target = $region12
      $region11: #{tpu_custom_call.1} parent=5 // pred_region
        %s146 = ssub.s32 %s17, 1
        // Predicated region
        $region13: #{tpu_custom_call.1} parent=11 // pred_check
          %p147 = pneg %p64
        $region14: #{tpu_custom_call.1} parent=11 // pred_check_branch
          %149 = sbr.rel (%p147) target = $region16
        $region15: #{tpu_custom_call.1} parent=11 // pred_region
          _
        $region16: #{tpu_custom_call.1} parent=11 // pred_fallthru
          _
        // Predicated region
        $region17: #{tpu_custom_call.1} parent=11 // pred_check
          %p150 = pneg %p85
        $region18: #{tpu_custom_call.1} parent=11 // pred_check_branch
          %152 = sbr.rel (%p150) target = $region20
        $region19: #{tpu_custom_call.1} parent=11 // pred_region
          _
        $region20: #{tpu_custom_call.1} parent=11 // pred_fallthru
          _
        // Predicated region
        $region21: #{tpu_custom_call.1} parent=11 // pred_check
          %p153 = pneg %p106
        $region22: #{tpu_custom_call.1} parent=11 // pred_check_branch
          %155 = sbr.rel (%p153) target = $region24
        $region23: #{tpu_custom_call.1} parent=11 // pred_region
          _
        $region24: #{tpu_custom_call.1} parent=11 // pred_fallthru
          _
      $region12: #{tpu_custom_call.1} parent=5 // pred_fallthru
        _
      %p156 = scmp.lt.s32.totalorder %s17, 2
      // Predicated region
      $region25: #{tpu_custom_call.1} parent=5 // pred_check
        %p157 = pneg %p156
      $region26: #{tpu_custom_call.1} parent=5 // pred_check_branch
        %159 = sbr.rel (%p157) target = $region28
      $region27: #{tpu_custom_call.1} parent=5 // pred_region
        // Predicated region
        $region29: #{tpu_custom_call.1} parent=27 // pred_check
          %p160 = pneg %p37
        $region30: #{tpu_custom_call.1} parent=27 // pred_check_branch
          %162 = sbr.rel (%p160) target = $region32
        $region31: #{tpu_custom_call.1} parent=27 // pred_region
          %s163 = sand.u32 %s27, 1
          %s164 = scalar_lea.sflag [#allocation4], %s163
          %s165 = sand.u32 %s27, 1
          %s166 = smul.addr %s165, 64
          %s167 = scalar_lea.vmem [#allocation3], %s166
          %s169 = ssub.s32 1024, 1024
          %170 = vsyncadd %s164, %s169
          %s171 = smul.addr %s17, 8
          %s172 = smul.addr %s171, 128
          %s173 = scalar_lea.hbm %s0, %s172
          %s174 = sshll.u32 %s167, 4
          %s175 = int_to_ptr.vmem [resolvable:$true] %s174
          %180 = dma.hbm_to_vmem [thread:$0]  %s173, 1024, %s175, %s164, 256, 256, 16
        $region32: #{tpu_custom_call.1} parent=27 // pred_fallthru
          _
      $region28: #{tpu_custom_call.1} parent=5 // pred_fallthru
        _
      %p181 = scmp.le.s32.totalorder 1, %s17
      %p182 = scmp.lt.s32.totalorder %s17, 3
      %p183 = pnand %p181, %p182
      %p184 = pneg %p183
      // Predicated region
      $region33: #{tpu_custom_call.1} parent=5 // pred_check
        _
      $region34: #{tpu_custom_call.1} parent=5 // pred_check_branch
        %186 = sbr.rel (%p183) target = $region36
      $region35: #{tpu_custom_call.1} parent=5 // pred_region
        %s187 = ssub.s32 %s17, 1
        %s188 = sand.u32 %s30, 1
        %s189 = scalar_lea.sflag [#allocation4], %s188
        %s190 = sand.u32 %s30, 1
        %s191 = smul.addr %s190, 64
        %s192 = scalar_lea.vmem [#allocation3], %s191
        // Predicated region
        $region37: #{tpu_custom_call.1} parent=35 // pred_check
          %p193 = pneg %p43
        $region38: #{tpu_custom_call.1} parent=35 // pred_check_branch
          %195 = sbr.rel (%p193) target = $region40
        $region39: #{tpu_custom_call.1} parent=35 // pred_region
          %196 = dma.done %s189, 1024
        $region40: #{tpu_custom_call.1} parent=35 // pred_fallthru
          _
        %s197 = sand.u32 %s30, 1
        %s198 = scalar_lea.sflag [#allocation4], %s197
        %s199 = sand.u32 %s30, 1
        %s200 = smul.addr %s199, 64
        %s201 = scalar_lea.vmem [#allocation3], %s200
        %p202 = pneg %p43
        %p203 = pneg %p40
        %p204 = pneg %p64
        %p205 = pneg %p61
        %p206 = pneg %p85
        %p207 = pneg %p82
        %p208 = pneg %p106
        %p209 = pneg %p103
        %p210 = pneg %p132
        %p211 = pneg %p129
        %s212 = sand.u32 %s119, 1
        %s213 = scalar_lea.sflag [#allocation5], %s212
        %s214 = sand.u32 %s119, 1
        %s215 = smul.addr %s214, 64
        %s216 = scalar_lea.vmem [#allocation6], %s215
        %v218 = vld [vmem:[%s192] sm:$0xff]
        %v219 = vld [vmem:[%s192 + $0x8] sm:$0xff]
        %v220 = vld [vmem:[%s192 + $0x10] sm:$0xff]
        %v221 = vld [vmem:[%s192 + $0x18] sm:$0xff]
        %v222 = vld [vmem:[%s192 + $0x20] sm:$0xff]
        %v223 = vld [vmem:[%s192 + $0x28] sm:$0xff]
        %v224 = vld [vmem:[%s192 + $0x30] sm:$0xff]
        %v225 = vld [vmem:[%s192 + $0x38] sm:$0xff]
        %v226 = vld [vmem:[%s1] sm:$0xf]
        %v227 = vld [vmem:[%s1 + $0x4] sm:$0xf]
        %v228 = vld [vmem:[%s1 + $0x8] sm:$0xf]
        %v229 = vld [vmem:[%s1 + $0xc] sm:$0xf]
        %v230 = vld [vmem:[%s1 + $0x10] sm:$0xf]
        %v231 = vld [vmem:[%s1 + $0x14] sm:$0xf]
        %v232 = vpack.c.bf16 %v220, %v218
        %v233 = vpack.c.bf16 %v221, %v219
        %v234 = vpack.c.bf16 %v224, %v222
        %v235 = vpack.c.bf16 %v225, %v223
        %v236 = vld [vmem:[%s2] sm:$0xff]
        %v237 = vld [vmem:[%s2 + $0x8] sm:$0xff]
        %v238 = vld [vmem:[%s2 + $0x10] sm:$0xff]
        %v239 = vld [vmem:[%s2 + $0x18] sm:$0xff]
        %v240 = vld [vmem:[%s2 + $0x20] sm:$0xff]
        %v241 = vld [vmem:[%s2 + $0x28] sm:$0xff]
        %243 = vset.pattern.permute.xlu0 0
        %244 = vperm.xlu0 %243, %v236
        %v245 = vpop.permute.xlu0 %244
        %248 = vset.pattern.permute.xlu0 0
        %249 = vperm.xlu0 %248, %v237
        %v250 = vpop.permute.xlu0 %249
        %253 = vset.pattern.permute.xlu0 0
        %254 = vperm.xlu0 %253, %v238
        %v255 = vpop.permute.xlu0 %254
        %258 = vset.pattern.permute.xlu0 0
        %259 = vperm.xlu0 %258, %v239
        %v260 = vpop.permute.xlu0 %259
        %263 = vset.pattern.permute.xlu0 0
        %264 = vperm.xlu0 %263, %v240
        %v265 = vpop.permute.xlu0 %264
        %268 = vset.pattern.permute.xlu0 0
        %269 = vperm.xlu0 %268, %v241
        %v270 = vpop.permute.xlu0 %269
        %v278 = vunpack.c.l.b16 %v226
        %v279 = vunpack.c.l.b16 %v227
        %v280 = vunpack.c.l.b16 %v228
        %v281 = vunpack.c.l.b16 %v229
        %v282 = vunpack.c.l.b16 %v230
        %v283 = vunpack.c.l.b16 %v231
        %v284 = vpack.c.b16 %v279, %v278
        %v285 = vpack.c.b16 %v281, %v280
        %v286 = vpack.c.b16 %v283, %v282
        %vm287 = vcmask 261120
        %v289 = vsel %vm287, %v284, 0
        %v292 = vsel %vm287, %v285, 0
        %v295 = vsel %vm287, %v286, 0
        %297 = vmatprep.subr.bf16.mxu0 0
        %298 = vmatpush1.bf16.msra.mxu0 0
        %299 = vmatprep.subr.bf16.mxu0 0
        %300 = vmatpush1.bf16.msra.mxu0 0
        %301 = vmatprep.subr.bf16.mxu0 0
        %302 = vmatpush1.bf16.msra.mxu0 0
        %303 = vmatprep.subr.bf16.mxu0 0
        %304 = vmatpush1.bf16.msra.mxu0 0
        %305 = vmatprep.subr.bf16.mxu0 0
        %306 = vmatpush1.bf16.msra.mxu0 0
        %307 = vmatprep.subr.bf16.mxu0 0
        %308 = vmatpush1.bf16.msra.mxu0 0
        %309 = vmatprep.subr.bf16.mxu0 %v235
        %310 = vmatpush1.bf16.msra.mxu0 %v234
        %311 = vmatprep.subr.bf16.mxu0 %v233
        %312 = vmatpush1.bf16.msra.mxu0 %v232
        %313 = vmatprep.subr.bf16.mxu0 0
        %314 = vmatpush2.bf16.msra.mxu0 0
        %315 = vmatprep.subr.bf16.mxu0 0
        %316 = vmatpush2.bf16.msra.mxu0 0
        %317 = vmatprep.subr.bf16.mxu0 0
        %318 = vmatpush2.bf16.msra.mxu0 0
        %319 = vmatprep.subr.bf16.mxu0 0
        %320 = vmatpush2.bf16.msra.mxu0 0
        %321 = vmatprep.subr.bf16.mxu0 0
        %322 = vmatpush2.bf16.msra.mxu0 0
        %323 = vmatprep.subr.bf16.mxu0 0
        %324 = vmatpush2.bf16.msra.mxu0 0
        %325 = vmatprep.subr.bf16.mxu0 0
        %326 = vmatpush2.bf16.msra.mxu0 0
        %327 = vmatprep.subr.bf16.mxu0 0
        %328 = vmatpush2.bf16.msra.mxu0 0
        %329 = vmatprep.mubr.bf16.mxu0 0
        %330 = vmatmul.mubr.bf16.gmra.mxu0 %v289
        %v331 = vpop.f32.mrf.mxu0
        %v332 = vadd.f32 %v245, %v331
        %v333 = vpop.f32.mrf.mxu0
        %v334 = vadd.f32 %v245, %v333
        %v335 = vpop.f32.mrf.mxu0
        %v336 = vadd.f32 %v250, %v335
        %v337 = vpop.f32.mrf.mxu0
        %v338 = vadd.f32 %v250, %v337
        %339 = vmatprep.mubr.bf16.mxu0 0
        %340 = vmatmul.mubr.bf16.gmra.mxu0 %v292
        %v341 = vpop.f32.mrf.mxu0
        %v342 = vadd.f32 %v255, %v341
        %v343 = vpop.f32.mrf.mxu0
        %v344 = vadd.f32 %v255, %v343
        %v345 = vpop.f32.mrf.mxu0
        %v346 = vadd.f32 %v260, %v345
        %v347 = vpop.f32.mrf.mxu0
        %v348 = vadd.f32 %v260, %v347
        %349 = vmatprep.mubr.bf16.mxu0 0
        %350 = vmatmul.mubr.bf16.gmra.mxu0 %v295
        %v351 = vpop.f32.mrf.mxu0
        %v352 = vadd.f32 %v265, %v351
        %v353 = vpop.f32.mrf.mxu0
        %v354 = vadd.f32 %v265, %v353
        %v355 = vpop.f32.mrf.mxu0
        %v356 = vadd.f32 %v270, %v355
        %v357 = vpop.f32.mrf.mxu0
        %v358 = vadd.f32 %v270, %v357
        %359 = vdwg.mxu0
        %v360 = vpack.c.bf16 %v332, %v332
        %v361 = vpack.c.bf16 %v334, %v334
        %v362 = vpack.c.bf16 %v336, %v336
        %v363 = vpack.c.bf16 %v338, %v338
        %v364 = vpack.c.bf16 %v346, %v342
        %v365 = vpack.c.bf16 %v348, %v344
        %v366 = vpack.c.bf16 %v356, %v352
        %v367 = vpack.c.bf16 %v358, %v354
        %368 = vxpose.xlu0.c.b16.start [1/8] %v360, 128
        %369 = vxpose.xlu0.c.b16.cont [2/8] 0, 128
        %370 = vxpose.xlu0.c.b16.cont [3/8] 0, 128
        %371 = vxpose.xlu0.c.b16.cont [4/8] 0, 128
        %372 = vxpose.xlu0.c.b16.cont [5/8] 0, 128
        %373 = vxpose.xlu0.c.b16.cont [6/8] 0, 128
        %374 = vxpose.xlu0.c.b16.cont [7/8] 0, 128
        %375 = vxpose.xlu0.c.b16.end [8/8] 0, 128
        %v376 = vpop.trf.xlu0
        %v377 = vpop.trf.xlu0
        %v378 = vpop.trf.xlu0
        %v379 = vpop.trf.xlu0
        %v380 = vpop.trf.xlu0
        %v381 = vpop.trf.xlu0
        %v382 = vpop.trf.xlu0
        %v383 = vpop.trf.xlu0
        %384 = vxpose.xlu0.c.b16.start [1/8] %v361, 128
        %385 = vxpose.xlu0.c.b16.cont [2/8] 0, 128
        %386 = vxpose.xlu0.c.b16.cont [3/8] 0, 128
        %387 = vxpose.xlu0.c.b16.cont [4/8] 0, 128
        %388 = vxpose.xlu0.c.b16.cont [5/8] 0, 128
        %389 = vxpose.xlu0.c.b16.cont [6/8] 0, 128
        %390 = vxpose.xlu0.c.b16.cont [7/8] 0, 128
        %391 = vxpose.xlu0.c.b16.end [8/8] 0, 128
        %v392 = vpop.trf.xlu0
        %v393 = vpop.trf.xlu0
        %v394 = vpop.trf.xlu0
        %v395 = vpop.trf.xlu0
        %v396 = vpop.trf.xlu0
        %v397 = vpop.trf.xlu0
        %v398 = vpop.trf.xlu0
        %v399 = vpop.trf.xlu0
        %vm400 = vcmask 64512
        %v402 = vsel %vm400, %v376, 0
        %v405 = vsel %vm400, %v377, 0
        %v408 = vsel %vm400, %v378, 0
        %v411 = vsel %vm400, %v379, 0
        %v414 = vsel %vm400, %v380, 0
        %v417 = vsel %vm400, %v381, 0
        %v420 = vsel %vm400, %v382, 0
        %v423 = vsel %vm400, %v383, 0
        %v426 = vsel %vm400, %v392, 0
        %v429 = vsel %vm400, %v393, 0
        %v432 = vsel %vm400, %v394, 0
        %v435 = vsel %vm400, %v395, 0
        %v438 = vsel %vm400, %v396, 0
        %v441 = vsel %vm400, %v397, 0
        %v444 = vsel %vm400, %v398, 0
        %v447 = vsel %vm400, %v399, 0
        %vm449 = vcmask 1043456
        %v451 = vsel %vm449, %v362, 0
        %v454 = vsel %vm449, %v363, 0
        %456 = vmatprep.subr.bf16.mxu0 0
        %457 = vmatpush1.bf16.msra.mxu0 0
        %458 = vmatprep.subr.bf16.mxu0 0
        %459 = vmatpush1.bf16.msra.mxu0 0
        %460 = vmatprep.subr.bf16.mxu0 0
        %461 = vmatpush1.bf16.msra.mxu0 0
        %462 = vmatprep.subr.bf16.mxu0 0
        %463 = vmatpush1.bf16.msra.mxu0 0
        %464 = vmatprep.subr.bf16.mxu0 0
        %465 = vmatpush1.bf16.msra.mxu0 0
        %466 = vmatprep.subr.bf16.mxu0 0
        %467 = vmatpush1.bf16.msra.mxu0 0
        %468 = vmatprep.subr.bf16.mxu0 0
        %469 = vmatpush1.bf16.msra.mxu0 0
        %470 = vmatprep.subr.bf16.mxu0 %v454
        %471 = vmatpush1.bf16.msra.mxu0 %v451
        %472 = vmatprep.subr.bf16.mxu0 0
        %473 = vmatpush2.bf16.msra.mxu0 0
        %474 = vmatprep.subr.bf16.mxu0 0
        %475 = vmatpush2.bf16.msra.mxu0 0
        %476 = vmatprep.subr.bf16.mxu0 0
        %477 = vmatpush2.bf16.msra.mxu0 0
        %478 = vmatprep.subr.bf16.mxu0 0
        %479 = vmatpush2.bf16.msra.mxu0 0
        %480 = vmatprep.subr.bf16.mxu0 0
        %481 = vmatpush2.bf16.msra.mxu0 0
        %482 = vmatprep.subr.bf16.mxu0 0
        %483 = vmatpush2.bf16.msra.mxu0 0
        %484 = vmatprep.subr.bf16.mxu0 0
        %485 = vmatpush2.bf16.msra.mxu0 0
        %486 = vmatprep.subr.bf16.mxu0 0
        %487 = vmatpush2.bf16.msra.mxu0 0
        %488 = vmatprep.mubr.bf16.mxu0 0
        %489 = vmatmul.mubr.bf16.gmra.mxu0 %v402
        %v490 = vpop.f32.mrf.mxu0
        %v491 = vadd.f32 0.0, %v490
        %v492 = vpop.f32.mrf.mxu0
        %v493 = vadd.f32 0.0, %v492
        %v494 = vpop.f32.mrf.mxu0
        %v495 = vadd.f32 0.0, %v494
        %v496 = vpop.f32.mrf.mxu0
        %v497 = vadd.f32 0.0, %v496
        %498 = vmatprep.mubr.bf16.mxu0 0
        %499 = vmatmul.mubr.bf16.gmra.mxu0 %v405
        %v500 = vpop.f32.mrf.mxu0
        %v501 = vadd.f32 0.0, %v500
        %v502 = vpop.f32.mrf.mxu0
        %v503 = vadd.f32 0.0, %v502
        %v504 = vpop.f32.mrf.mxu0
        %v505 = vadd.f32 0.0, %v504
        %v506 = vpop.f32.mrf.mxu0
        %v507 = vadd.f32 0.0, %v506
        %508 = vmatprep.mubr.bf16.mxu0 0
        %509 = vmatmul.mubr.bf16.gmra.mxu0 %v408
        %v510 = vpop.f32.mrf.mxu0
        %v511 = vadd.f32 0.0, %v510
        %v512 = vpop.f32.mrf.mxu0
        %v513 = vadd.f32 0.0, %v512
        %v514 = vpop.f32.mrf.mxu0
        %v515 = vadd.f32 0.0, %v514
        %v516 = vpop.f32.mrf.mxu0
        %v517 = vadd.f32 0.0, %v516
        %518 = vmatprep.mubr.bf16.mxu0 0
        %519 = vmatmul.mubr.bf16.gmra.mxu0 %v411
        %v520 = vpop.f32.mrf.mxu0
        %v521 = vadd.f32 0.0, %v520
        %v522 = vpop.f32.mrf.mxu0
        %v523 = vadd.f32 0.0, %v522
        %v524 = vpop.f32.mrf.mxu0
        %v525 = vadd.f32 0.0, %v524
        %v526 = vpop.f32.mrf.mxu0
        %v527 = vadd.f32 0.0, %v526
        %528 = vmatprep.mubr.bf16.mxu0 0
        %529 = vmatmul.mubr.bf16.gmra.mxu0 %v414
        %v530 = vpop.f32.mrf.mxu0
        %v531 = vadd.f32 0.0, %v530
        %v532 = vpop.f32.mrf.mxu0
        %v533 = vadd.f32 0.0, %v532
        %v534 = vpop.f32.mrf.mxu0
        %v535 = vadd.f32 0.0, %v534
        %v536 = vpop.f32.mrf.mxu0
        %v537 = vadd.f32 0.0, %v536
        %538 = vmatprep.mubr.bf16.mxu0 0
        %539 = vmatmul.mubr.bf16.gmra.mxu0 %v417
        %v540 = vpop.f32.mrf.mxu0
        %v541 = vadd.f32 0.0, %v540
        %v542 = vpop.f32.mrf.mxu0
        %v543 = vadd.f32 0.0, %v542
        %v544 = vpop.f32.mrf.mxu0
        %v545 = vadd.f32 0.0, %v544
        %v546 = vpop.f32.mrf.mxu0
        %v547 = vadd.f32 0.0, %v546
        %548 = vmatprep.mubr.bf16.mxu0 0
        %549 = vmatmul.mubr.bf16.gmra.mxu0 %v420
        %v550 = vpop.f32.mrf.mxu0
        %v551 = vadd.f32 0.0, %v550
        %v552 = vpop.f32.mrf.mxu0
        %v553 = vadd.f32 0.0, %v552
        %v554 = vpop.f32.mrf.mxu0
        %v555 = vadd.f32 0.0, %v554
        %v556 = vpop.f32.mrf.mxu0
        %v557 = vadd.f32 0.0, %v556
        %558 = vmatprep.mubr.bf16.mxu0 0
        %559 = vmatmul.mubr.bf16.gmra.mxu0 %v423
        %v560 = vpop.f32.mrf.mxu0
        %v561 = vadd.f32 0.0, %v560
        %v562 = vpop.f32.mrf.mxu0
        %v563 = vadd.f32 0.0, %v562
        %v564 = vpop.f32.mrf.mxu0
        %v565 = vadd.f32 0.0, %v564
        %v566 = vpop.f32.mrf.mxu0
        %v567 = vadd.f32 0.0, %v566
        %568 = vmatprep.mubr.bf16.mxu0 0
        %569 = vmatmul.mubr.bf16.gmra.mxu0 %v426
        %v570 = vpop.f32.mrf.mxu0
        %v571 = vadd.f32 0.0, %v570
        %v572 = vpop.f32.mrf.mxu0
        %v573 = vadd.f32 0.0, %v572
        %v574 = vpop.f32.mrf.mxu0
        %v575 = vadd.f32 0.0, %v574
        %v576 = vpop.f32.mrf.mxu0
        %v577 = vadd.f32 0.0, %v576
        %578 = vmatprep.mubr.bf16.mxu0 0
        %579 = vmatmul.mubr.bf16.gmra.mxu0 %v429
        %v580 = vpop.f32.mrf.mxu0
        %v581 = vadd.f32 0.0, %v580
        %v582 = vpop.f32.mrf.mxu0
        %v583 = vadd.f32 0.0, %v582
        %v584 = vpop.f32.mrf.mxu0
        %v585 = vadd.f32 0.0, %v584
        %v586 = vpop.f32.mrf.mxu0
        %v587 = vadd.f32 0.0, %v586
        %588 = vmatprep.mubr.bf16.mxu0 0
        %589 = vmatmul.mubr.bf16.gmra.mxu0 %v432
        %v590 = vpop.f32.mrf.mxu0
        %v591 = vadd.f32 0.0, %v590
        %v592 = vpop.f32.mrf.mxu0
        %v593 = vadd.f32 0.0, %v592
        %v594 = vpop.f32.mrf.mxu0
        %v595 = vadd.f32 0.0, %v594
        %v596 = vpop.f32.mrf.mxu0
        %v597 = vadd.f32 0.0, %v596
        %598 = vmatprep.mubr.bf16.mxu0 0
        %599 = vmatmul.mubr.bf16.gmra.mxu0 %v435
        %v600 = vpop.f32.mrf.mxu0
        %v601 = vadd.f32 0.0, %v600
        %v602 = vpop.f32.mrf.mxu0
        %v603 = vadd.f32 0.0, %v602
        %v604 = vpop.f32.mrf.mxu0
        %v605 = vadd.f32 0.0, %v604
        %v606 = vpop.f32.mrf.mxu0
        %v607 = vadd.f32 0.0, %v606
        %608 = vmatprep.mubr.bf16.mxu0 0
        %609 = vmatmul.mubr.bf16.gmra.mxu0 %v438
        %v610 = vpop.f32.mrf.mxu0
        %v611 = vadd.f32 0.0, %v610
        %v612 = vpop.f32.mrf.mxu0
        %v613 = vadd.f32 0.0, %v612
        %v614 = vpop.f32.mrf.mxu0
        %v615 = vadd.f32 0.0, %v614
        %v616 = vpop.f32.mrf.mxu0
        %v617 = vadd.f32 0.0, %v616
        %618 = vmatprep.mubr.bf16.mxu0 0
        %619 = vmatmul.mubr.bf16.gmra.mxu0 %v441
        %v620 = vpop.f32.mrf.mxu0
        %v621 = vadd.f32 0.0, %v620
        %v622 = vpop.f32.mrf.mxu0
        %v623 = vadd.f32 0.0, %v622
        %v624 = vpop.f32.mrf.mxu0
        %v625 = vadd.f32 0.0, %v624
        %v626 = vpop.f32.mrf.mxu0
        %v627 = vadd.f32 0.0, %v626
        %628 = vmatprep.mubr.bf16.mxu0 0
        %629 = vmatmul.mubr.bf16.gmra.mxu0 %v444
        %v630 = vpop.f32.mrf.mxu0
        %v631 = vadd.f32 0.0, %v630
        %v632 = vpop.f32.mrf.mxu0
        %v633 = vadd.f32 0.0, %v632
        %v634 = vpop.f32.mrf.mxu0
        %v635 = vadd.f32 0.0, %v634
        %v636 = vpop.f32.mrf.mxu0
        %v637 = vadd.f32 0.0, %v636
        %638 = vmatprep.mubr.bf16.mxu0 0
        %639 = vmatmul.mubr.bf16.gmra.mxu0 %v447
        %v640 = vpop.f32.mrf.mxu0
        %v641 = vadd.f32 0.0, %v640
        %v642 = vpop.f32.mrf.mxu0
        %v643 = vadd.f32 0.0, %v642
        %v644 = vpop.f32.mrf.mxu0
        %v645 = vadd.f32 0.0, %v644
        %v646 = vpop.f32.mrf.mxu0
        %v647 = vadd.f32 0.0, %v646
        %648 = vdwg.mxu0
        %v649 = vmax.f32 %v491, %v493
        %650 = vmax.xlane.f32.xlu0 %v649
        %v651 = vpop.xlane.xlu0 %650
        %v652 = vmax.f32 %v495, %v497
        %653 = vmax.xlane.f32.xlu0 %v652
        %v654 = vpop.xlane.xlu0 %653
        %v655 = vmax.f32 %v501, %v503
        %656 = vmax.xlane.f32.xlu0 %v655
        %v657 = vpop.xlane.xlu0 %656
        %v658 = vmax.f32 %v505, %v507
        %659 = vmax.xlane.f32.xlu0 %v658
        %v660 = vpop.xlane.xlu0 %659
        %v661 = vmax.f32 %v511, %v513
        %662 = vmax.xlane.f32.xlu0 %v661
        %v663 = vpop.xlane.xlu0 %662
        %v664 = vmax.f32 %v515, %v517
        %665 = vmax.xlane.f32.xlu0 %v664
        %v666 = vpop.xlane.xlu0 %665
        %v667 = vmax.f32 %v521, %v523
        %668 = vmax.xlane.f32.xlu0 %v667
        %v669 = vpop.xlane.xlu0 %668
        %v670 = vmax.f32 %v525, %v527
        %671 = vmax.xlane.f32.xlu0 %v670
        %v672 = vpop.xlane.xlu0 %671
        %v673 = vmax.f32 %v531, %v533
        %674 = vmax.xlane.f32.xlu0 %v673
        %v675 = vpop.xlane.xlu0 %674
        %v676 = vmax.f32 %v535, %v537
        %677 = vmax.xlane.f32.xlu0 %v676
        %v678 = vpop.xlane.xlu0 %677
        %v679 = vmax.f32 %v541, %v543
        %680 = vmax.xlane.f32.xlu0 %v679
        %v681 = vpop.xlane.xlu0 %680
        %v682 = vmax.f32 %v545, %v547
        %683 = vmax.xlane.f32.xlu0 %v682
        %v684 = vpop.xlane.xlu0 %683
        %v685 = vmax.f32 %v551, %v553
        %686 = vmax.xlane.f32.xlu0 %v685
        %v687 = vpop.xlane.xlu0 %686
        %v688 = vmax.f32 %v555, %v557
        %689 = vmax.xlane.f32.xlu0 %v688
        %v690 = vpop.xlane.xlu0 %689
        %v691 = vmax.f32 %v561, %v563
        %692 = vmax.xlane.f32.xlu0 %v691
        %v693 = vpop.xlane.xlu0 %692
        %v694 = vmax.f32 %v565, %v567
        %695 = vmax.xlane.f32.xlu0 %v694
        %v696 = vpop.xlane.xlu0 %695
        %v697 = vmax.f32 %v571, %v573
        %698 = vmax.xlane.f32.xlu0 %v697
        %v699 = vpop.xlane.xlu0 %698
        %v700 = vmax.f32 %v575, %v577
        %701 = vmax.xlane.f32.xlu0 %v700
        %v702 = vpop.xlane.xlu0 %701
        %v703 = vmax.f32 %v581, %v583
        %704 = vmax.xlane.f32.xlu0 %v703
        %v705 = vpop.xlane.xlu0 %704
        %v706 = vmax.f32 %v585, %v587
        %707 = vmax.xlane.f32.xlu0 %v706
        %v708 = vpop.xlane.xlu0 %707
        %v709 = vmax.f32 %v591, %v593
        %710 = vmax.xlane.f32.xlu0 %v709
        %v711 = vpop.xlane.xlu0 %710
        %v712 = vmax.f32 %v595, %v597
        %713 = vmax.xlane.f32.xlu0 %v712
        %v714 = vpop.xlane.xlu0 %713
        %v715 = vmax.f32 %v601, %v603
        %716 = vmax.xlane.f32.xlu0 %v715
        %v717 = vpop.xlane.xlu0 %716
        %v718 = vmax.f32 %v605, %v607
        %719 = vmax.xlane.f32.xlu0 %v718
        %v720 = vpop.xlane.xlu0 %719
        %v721 = vmax.f32 %v611, %v613
        %722 = vmax.xlane.f32.xlu0 %v721
        %v723 = vpop.xlane.xlu0 %722
        %v724 = vmax.f32 %v615, %v617
        %725 = vmax.xlane.f32.xlu0 %v724
        %v726 = vpop.xlane.xlu0 %725
        %v727 = vmax.f32 %v621, %v623
        %728 = vmax.xlane.f32.xlu0 %v727
        %v729 = vpop.xlane.xlu0 %728
        %v730 = vmax.f32 %v625, %v627
        %731 = vmax.xlane.f32.xlu0 %v730
        %v732 = vpop.xlane.xlu0 %731
        %v733 = vmax.f32 %v631, %v633
        %734 = vmax.xlane.f32.xlu0 %v733
        %v735 = vpop.xlane.xlu0 %734
        %v736 = vmax.f32 %v635, %v637
        %737 = vmax.xlane.f32.xlu0 %v736
        %v738 = vpop.xlane.xlu0 %737
        %v739 = vmax.f32 %v641, %v643
        %740 = vmax.xlane.f32.xlu0 %v739
        %v741 = vpop.xlane.xlu0 %740
        %v742 = vmax.f32 %v645, %v647
        %743 = vmax.xlane.f32.xlu0 %v742
        %v744 = vpop.xlane.xlu0 %743
        %v745 = vsub.f32 %v491, %v651
        %v746 = vsub.f32 %v493, %v651
        %v747 = vsub.f32 %v495, %v654
        %v748 = vsub.f32 %v497, %v654
        %v749 = vsub.f32 %v501, %v657
        %v750 = vsub.f32 %v503, %v657
        %v751 = vsub.f32 %v505, %v660
        %v752 = vsub.f32 %v507, %v660
        %v753 = vsub.f32 %v511, %v663
        %v754 = vsub.f32 %v513, %v663
        %v755 = vsub.f32 %v515, %v666
        %v756 = vsub.f32 %v517, %v666
        %v757 = vsub.f32 %v521, %v669
        %v758 = vsub.f32 %v523, %v669
        %v759 = vsub.f32 %v525, %v672
        %v760 = vsub.f32 %v527, %v672
        %v761 = vsub.f32 %v531, %v675
        %v762 = vsub.f32 %v533, %v675
        %v763 = vsub.f32 %v535, %v678
        %v764 = vsub.f32 %v537, %v678
        %v765 = vsub.f32 %v541, %v681
        %v766 = vsub.f32 %v543, %v681
        %v767 = vsub.f32 %v545, %v684
        %v768 = vsub.f32 %v547, %v684
        %v769 = vsub.f32 %v551, %v687
        %v770 = vsub.f32 %v553, %v687
        %v771 = vsub.f32 %v555, %v690
        %v772 = vsub.f32 %v557, %v690
        %v773 = vsub.f32 %v561, %v693
        %v774 = vsub.f32 %v563, %v693
        %v775 = vsub.f32 %v565, %v696
        %v776 = vsub.f32 %v567, %v696
        %v777 = vsub.f32 %v571, %v699
        %v778 = vsub.f32 %v573, %v699
        %v779 = vsub.f32 %v575, %v702
        %v780 = vsub.f32 %v577, %v702
        %v781 = vsub.f32 %v581, %v705
        %v782 = vsub.f32 %v583, %v705
        %v783 = vsub.f32 %v585, %v708
        %v784 = vsub.f32 %v587, %v708
        %v785 = vsub.f32 %v591, %v711
        %v786 = vsub.f32 %v593, %v711
        %v787 = vsub.f32 %v595, %v714
        %v788 = vsub.f32 %v597, %v714
        %v789 = vsub.f32 %v601, %v717
        %v790 = vsub.f32 %v603, %v717
        %v791 = vsub.f32 %v605, %v720
        %v792 = vsub.f32 %v607, %v720
        %v793 = vsub.f32 %v611, %v723
        %v794 = vsub.f32 %v613, %v723
        %v795 = vsub.f32 %v615, %v726
        %v796 = vsub.f32 %v617, %v726
        %v797 = vsub.f32 %v621, %v729
        %v798 = vsub.f32 %v623, %v729
        %v799 = vsub.f32 %v625, %v732
        %v800 = vsub.f32 %v627, %v732
        %v801 = vsub.f32 %v631, %v735
        %v802 = vsub.f32 %v633, %v735
        %v803 = vsub.f32 %v635, %v738
        %v804 = vsub.f32 %v637, %v738
        %v805 = vsub.f32 %v641, %v741
        %v806 = vsub.f32 %v643, %v741
        %v807 = vsub.f32 %v645, %v744
        %v808 = vsub.f32 %v647, %v744
        %v809 = vmul.f32 %v745, 1.442695
        %v810 = vpow.pop %v809
        %v811 = vmul.f32 %v746, 1.442695
        %v812 = vpow.pop %v811
        %v813 = vmul.f32 %v747, 1.442695
        %v814 = vpow.pop %v813
        %v815 = vmul.f32 %v748, 1.442695
        %v816 = vpow.pop %v815
        %v817 = vmul.f32 %v749, 1.442695
        %v818 = vpow.pop %v817
        %v819 = vmul.f32 %v750, 1.442695
        %v820 = vpow.pop %v819
        %v821 = vmul.f32 %v751, 1.442695
        %v822 = vpow.pop %v821
        %v823 = vmul.f32 %v752, 1.442695
        %v824 = vpow.pop %v823
        %v825 = vmul.f32 %v753, 1.442695
        %v826 = vpow.pop %v825
        %v827 = vmul.f32 %v754, 1.442695
        %v828 = vpow.pop %v827
        %v829 = vmul.f32 %v755, 1.442695
        %v830 = vpow.pop %v829
        %v831 = vmul.f32 %v756, 1.442695
        %v832 = vpow.pop %v831
        %v833 = vmul.f32 %v757, 1.442695
        %v834 = vpow.pop %v833
        %v835 = vmul.f32 %v758, 1.442695
        %v836 = vpow.pop %v835
        %v837 = vmul.f32 %v759, 1.442695
        %v838 = vpow.pop %v837
        %v839 = vmul.f32 %v760, 1.442695
        %v840 = vpow.pop %v839
        %v841 = vmul.f32 %v761, 1.442695
        %v842 = vpow.pop %v841
        %v843 = vmul.f32 %v762, 1.442695
        %v844 = vpow.pop %v843
        %v845 = vmul.f32 %v763, 1.442695
        %v846 = vpow.pop %v845
        %v847 = vmul.f32 %v764, 1.442695
        %v848 = vpow.pop %v847
        %v849 = vmul.f32 %v765, 1.442695
        %v850 = vpow.pop %v849
        %v851 = vmul.f32 %v766, 1.442695
        %v852 = vpow.pop %v851
        %v853 = vmul.f32 %v767, 1.442695
        %v854 = vpow.pop %v853
        %v855 = vmul.f32 %v768, 1.442695
        %v856 = vpow.pop %v855
        %v857 = vmul.f32 %v769, 1.442695
        %v858 = vpow.pop %v857
        %v859 = vmul.f32 %v770, 1.442695
        %v860 = vpow.pop %v859
        %v861 = vmul.f32 %v771, 1.442695
        %v862 = vpow.pop %v861
        %v863 = vmul.f32 %v772, 1.442695
        %v864 = vpow.pop %v863
        %v865 = vmul.f32 %v773, 1.442695
        %v866 = vpow.pop %v865
        %v867 = vmul.f32 %v774, 1.442695
        %v868 = vpow.pop %v867
        %v869 = vmul.f32 %v775, 1.442695
        %v870 = vpow.pop %v869
        %v871 = vmul.f32 %v776, 1.442695
        %v872 = vpow.pop %v871
        %v873 = vmul.f32 %v777, 1.442695
        %v874 = vpow.pop %v873
        %v875 = vmul.f32 %v778, 1.442695
        %v876 = vpow.pop %v875
        %v877 = vmul.f32 %v779, 1.442695
        %v878 = vpow.pop %v877
        %v879 = vmul.f32 %v780, 1.442695
        %v880 = vpow.pop %v879
        %v881 = vmul.f32 %v781, 1.442695
        %v882 = vpow.pop %v881
        %v883 = vmul.f32 %v782, 1.442695
        %v884 = vpow.pop %v883
        %v885 = vmul.f32 %v783, 1.442695
        %v886 = vpow.pop %v885
        %v887 = vmul.f32 %v784, 1.442695
        %v888 = vpow.pop %v887
        %v889 = vmul.f32 %v785, 1.442695
        %v890 = vpow.pop %v889
        %v891 = vmul.f32 %v786, 1.442695
        %v892 = vpow.pop %v891
        %v893 = vmul.f32 %v787, 1.442695
        %v894 = vpow.pop %v893
        %v895 = vmul.f32 %v788, 1.442695
        %v896 = vpow.pop %v895
        %v897 = vmul.f32 %v789, 1.442695
        %v898 = vpow.pop %v897
        %v899 = vmul.f32 %v790, 1.442695
        %v900 = vpow.pop %v899
        %v901 = vmul.f32 %v791, 1.442695
        %v902 = vpow.pop %v901
        %v903 = vmul.f32 %v792, 1.442695
        %v904 = vpow.pop %v903
        %v905 = vmul.f32 %v793, 1.442695
        %v906 = vpow.pop %v905
        %v907 = vmul.f32 %v794, 1.442695
        %v908 = vpow.pop %v907
        %v909 = vmul.f32 %v795, 1.442695
        %v910 = vpow.pop %v909
        %v911 = vmul.f32 %v796, 1.442695
        %v912 = vpow.pop %v911
        %v913 = vmul.f32 %v797, 1.442695
        %v914 = vpow.pop %v913
        %v915 = vmul.f32 %v798, 1.442695
        %v916 = vpow.pop %v915
        %v917 = vmul.f32 %v799, 1.442695
        %v918 = vpow.pop %v917
        %v919 = vmul.f32 %v800, 1.442695
        %v920 = vpow.pop %v919
        %v921 = vmul.f32 %v801, 1.442695
        %v922 = vpow.pop %v921
        %v923 = vmul.f32 %v802, 1.442695
        %v924 = vpow.pop %v923
        %v925 = vmul.f32 %v803, 1.442695
        %v926 = vpow.pop %v925
        %v927 = vmul.f32 %v804, 1.442695
        %v928 = vpow.pop %v927
        %v929 = vmul.f32 %v805, 1.442695
        %v930 = vpow.pop %v929
        %v931 = vmul.f32 %v806, 1.442695
        %v932 = vpow.pop %v931
        %v933 = vmul.f32 %v807, 1.442695
        %v934 = vpow.pop %v933
        %v935 = vmul.f32 %v808, 1.442695
        %v936 = vpow.pop %v935
        %v937 = vadd.f32 %v810, %v812
        %938 = vadd.xlane.f32.xlu0 %v937
        %v939 = vpop.xlane.xlu0 %938
        %v940 = vadd.f32 %v814, %v816
        %941 = vadd.xlane.f32.xlu0 %v940
        %v942 = vpop.xlane.xlu0 %941
        %v943 = vadd.f32 %v818, %v820
        %944 = vadd.xlane.f32.xlu0 %v943
        %v945 = vpop.xlane.xlu0 %944
        %v946 = vadd.f32 %v822, %v824
        %947 = vadd.xlane.f32.xlu0 %v946
        %v948 = vpop.xlane.xlu0 %947
        %v949 = vadd.f32 %v826, %v828
        %950 = vadd.xlane.f32.xlu0 %v949
        %v951 = vpop.xlane.xlu0 %950
        %v952 = vadd.f32 %v830, %v832
        %953 = vadd.xlane.f32.xlu0 %v952
        %v954 = vpop.xlane.xlu0 %953
        %v955 = vadd.f32 %v834, %v836
        %956 = vadd.xlane.f32.xlu0 %v955
        %v957 = vpop.xlane.xlu0 %956
        %v958 = vadd.f32 %v838, %v840
        %959 = vadd.xlane.f32.xlu0 %v958
        %v960 = vpop.xlane.xlu0 %959
        %v961 = vadd.f32 %v842, %v844
        %962 = vadd.xlane.f32.xlu0 %v961
        %v963 = vpop.xlane.xlu0 %962
        %v964 = vadd.f32 %v846, %v848
        %965 = vadd.xlane.f32.xlu0 %v964
        %v966 = vpop.xlane.xlu0 %965
        %v967 = vadd.f32 %v850, %v852
        %968 = vadd.xlane.f32.xlu0 %v967
        %v969 = vpop.xlane.xlu0 %968
        %v970 = vadd.f32 %v854, %v856
        %971 = vadd.xlane.f32.xlu0 %v970
        %v972 = vpop.xlane.xlu0 %971
        %v973 = vadd.f32 %v858, %v860
        %974 = vadd.xlane.f32.xlu0 %v973
        %v975 = vpop.xlane.xlu0 %974
        %v976 = vadd.f32 %v862, %v864
        %977 = vadd.xlane.f32.xlu0 %v976
        %v978 = vpop.xlane.xlu0 %977
        %v979 = vadd.f32 %v866, %v868
        %980 = vadd.xlane.f32.xlu0 %v979
        %v981 = vpop.xlane.xlu0 %980
        %v982 = vadd.f32 %v870, %v872
        %983 = vadd.xlane.f32.xlu0 %v982
        %v984 = vpop.xlane.xlu0 %983
        %v985 = vadd.f32 %v874, %v876
        %986 = vadd.xlane.f32.xlu0 %v985
        %v987 = vpop.xlane.xlu0 %986
        %v988 = vadd.f32 %v878, %v880
        %989 = vadd.xlane.f32.xlu0 %v988
        %v990 = vpop.xlane.xlu0 %989
        %v991 = vadd.f32 %v882, %v884
        %992 = vadd.xlane.f32.xlu0 %v991
        %v993 = vpop.xlane.xlu0 %992
        %v994 = vadd.f32 %v886, %v888
        %995 = vadd.xlane.f32.xlu0 %v994
        %v996 = vpop.xlane.xlu0 %995
        %v997 = vadd.f32 %v890, %v892
        %998 = vadd.xlane.f32.xlu0 %v997
        %v999 = vpop.xlane.xlu0 %998
        %v1000 = vadd.f32 %v894, %v896
        %1001 = vadd.xlane.f32.xlu0 %v1000
        %v1002 = vpop.xlane.xlu0 %1001
        %v1003 = vadd.f32 %v898, %v900
        %1004 = vadd.xlane.f32.xlu0 %v1003
        %v1005 = vpop.xlane.xlu0 %1004
        %v1006 = vadd.f32 %v902, %v904
        %1007 = vadd.xlane.f32.xlu0 %v1006
        %v1008 = vpop.xlane.xlu0 %1007
        %v1009 = vadd.f32 %v906, %v908
        %1010 = vadd.xlane.f32.xlu0 %v1009
        %v1011 = vpop.xlane.xlu0 %1010
        %v1012 = vadd.f32 %v910, %v912
        %1013 = vadd.xlane.f32.xlu0 %v1012
        %v1014 = vpop.xlane.xlu0 %1013
        %v1015 = vadd.f32 %v914, %v916
        %1016 = vadd.xlane.f32.xlu0 %v1015
        %v1017 = vpop.xlane.xlu0 %1016
        %v1018 = vadd.f32 %v918, %v920
        %1019 = vadd.xlane.f32.xlu0 %v1018
        %v1020 = vpop.xlane.xlu0 %1019
        %v1021 = vadd.f32 %v922, %v924
        %1022 = vadd.xlane.f32.xlu0 %v1021
        %v1023 = vpop.xlane.xlu0 %1022
        %v1024 = vadd.f32 %v926, %v928
        %1025 = vadd.xlane.f32.xlu0 %v1024
        %v1026 = vpop.xlane.xlu0 %1025
        %v1027 = vadd.f32 %v930, %v932
        %1028 = vadd.xlane.f32.xlu0 %v1027
        %v1029 = vpop.xlane.xlu0 %1028
        %v1030 = vadd.f32 %v934, %v936
        %1031 = vadd.xlane.f32.xlu0 %v1030
        %v1032 = vpop.xlane.xlu0 %1031
        %v1033 = vrcp.pop %v939
        %v1034 = vrcp.pop %v942
        %v1035 = vrcp.pop %v945
        %v1036 = vrcp.pop %v948
        %v1037 = vrcp.pop %v951
        %v1038 = vrcp.pop %v954
        %v1039 = vrcp.pop %v957
        %v1040 = vrcp.pop %v960
        %v1041 = vrcp.pop %v963
        %v1042 = vrcp.pop %v966
        %v1043 = vrcp.pop %v969
        %v1044 = vrcp.pop %v972
        %v1045 = vrcp.pop %v975
        %v1046 = vrcp.pop %v978
        %v1047 = vrcp.pop %v981
        %v1048 = vrcp.pop %v984
        %v1049 = vrcp.pop %v987
        %v1050 = vrcp.pop %v990
        %v1051 = vrcp.pop %v993
        %v1052 = vrcp.pop %v996
        %v1053 = vrcp.pop %v999
        %v1054 = vrcp.pop %v1002
        %v1055 = vrcp.pop %v1005
        %v1056 = vrcp.pop %v1008
        %v1057 = vrcp.pop %v1011
        %v1058 = vrcp.pop %v1014
        %v1059 = vrcp.pop %v1017
        %v1060 = vrcp.pop %v1020
        %v1061 = vrcp.pop %v1023
        %v1062 = vrcp.pop %v1026
        %v1063 = vrcp.pop %v1029
        %v1064 = vrcp.pop %v1032
        %v1065 = vmul.f32 %v810, %v1033
        %v1066 = vmul.f32 %v812, %v1033
        %v1067 = vmul.f32 %v814, %v1034
        %v1068 = vmul.f32 %v816, %v1034
        %v1069 = vmul.f32 %v818, %v1035
        %v1070 = vmul.f32 %v820, %v1035
        %v1071 = vmul.f32 %v822, %v1036
        %v1072 = vmul.f32 %v824, %v1036
        %v1073 = vmul.f32 %v826, %v1037
        %v1074 = vmul.f32 %v828, %v1037
        %v1075 = vmul.f32 %v830, %v1038
        %v1076 = vmul.f32 %v832, %v1038
        %v1077 = vmul.f32 %v834, %v1039
        %v1078 = vmul.f32 %v836, %v1039
        %v1079 = vmul.f32 %v838, %v1040
        %v1080 = vmul.f32 %v840, %v1040
        %v1081 = vmul.f32 %v842, %v1041
        %v1082 = vmul.f32 %v844, %v1041
        %v1083 = vmul.f32 %v846, %v1042
        %v1084 = vmul.f32 %v848, %v1042
        %v1085 = vmul.f32 %v850, %v1043
        %v1086 = vmul.f32 %v852, %v1043
        %v1087 = vmul.f32 %v854, %v1044
        %v1088 = vmul.f32 %v856, %v1044
        %v1089 = vmul.f32 %v858, %v1045
        %v1090 = vmul.f32 %v860, %v1045
        %v1091 = vmul.f32 %v862, %v1046
        %v1092 = vmul.f32 %v864, %v1046
        %v1093 = vmul.f32 %v866, %v1047
        %v1094 = vmul.f32 %v868, %v1047
        %v1095 = vmul.f32 %v870, %v1048
        %v1096 = vmul.f32 %v872, %v1048
        %v1097 = vmul.f32 %v874, %v1049
        %v1098 = vmul.f32 %v876, %v1049
        %v1099 = vmul.f32 %v878, %v1050
        %v1100 = vmul.f32 %v880, %v1050
        %v1101 = vmul.f32 %v882, %v1051
        %v1102 = vmul.f32 %v884, %v1051
        %v1103 = vmul.f32 %v886, %v1052
        %v1104 = vmul.f32 %v888, %v1052
        %v1105 = vmul.f32 %v890, %v1053
        %v1106 = vmul.f32 %v892, %v1053
        %v1107 = vmul.f32 %v894, %v1054
        %v1108 = vmul.f32 %v896, %v1054
        %v1109 = vmul.f32 %v898, %v1055
        %v1110 = vmul.f32 %v900, %v1055
        %v1111 = vmul.f32 %v902, %v1056
        %v1112 = vmul.f32 %v904, %v1056
        %v1113 = vmul.f32 %v906, %v1057
        %v1114 = vmul.f32 %v908, %v1057
        %v1115 = vmul.f32 %v910, %v1058
        %v1116 = vmul.f32 %v912, %v1058
        %v1117 = vmul.f32 %v914, %v1059
        %v1118 = vmul.f32 %v916, %v1059
        %v1119 = vmul.f32 %v918, %v1060
        %v1120 = vmul.f32 %v920, %v1060
        %v1121 = vmul.f32 %v922, %v1061
        %v1122 = vmul.f32 %v924, %v1061
        %v1123 = vmul.f32 %v926, %v1062
        %v1124 = vmul.f32 %v928, %v1062
        %v1125 = vmul.f32 %v930, %v1063
        %v1126 = vmul.f32 %v932, %v1063
        %v1127 = vmul.f32 %v934, %v1064
        %v1128 = vmul.f32 %v936, %v1064
        %v1129 = vpack.c.bf16 %v1067, %v1065
        %v1130 = vpack.c.bf16 %v1068, %v1066
        %v1131 = vpack.c.bf16 %v1071, %v1069
        %v1132 = vpack.c.bf16 %v1072, %v1070
        %v1133 = vpack.c.bf16 %v1075, %v1073
        %v1134 = vpack.c.bf16 %v1076, %v1074
        %v1135 = vpack.c.bf16 %v1079, %v1077
        %v1136 = vpack.c.bf16 %v1080, %v1078
        %v1137 = vpack.c.bf16 %v1083, %v1081
        %v1138 = vpack.c.bf16 %v1084, %v1082
        %v1139 = vpack.c.bf16 %v1087, %v1085
        %v1140 = vpack.c.bf16 %v1088, %v1086
        %v1141 = vpack.c.bf16 %v1091, %v1089
        %v1142 = vpack.c.bf16 %v1092, %v1090
        %v1143 = vpack.c.bf16 %v1095, %v1093
        %v1144 = vpack.c.bf16 %v1096, %v1094
        %v1145 = vpack.c.bf16 %v1099, %v1097
        %v1146 = vpack.c.bf16 %v1100, %v1098
        %v1147 = vpack.c.bf16 %v1103, %v1101
        %v1148 = vpack.c.bf16 %v1104, %v1102
        %v1149 = vpack.c.bf16 %v1107, %v1105
        %v1150 = vpack.c.bf16 %v1108, %v1106
        %v1151 = vpack.c.bf16 %v1111, %v1109
        %v1152 = vpack.c.bf16 %v1112, %v1110
        %v1153 = vpack.c.bf16 %v1115, %v1113
        %v1154 = vpack.c.bf16 %v1116, %v1114
        %v1155 = vpack.c.bf16 %v1119, %v1117
        %v1156 = vpack.c.bf16 %v1120, %v1118
        %v1157 = vpack.c.bf16 %v1123, %v1121
        %v1158 = vpack.c.bf16 %v1124, %v1122
        %v1159 = vpack.c.bf16 %v1127, %v1125
        %v1160 = vpack.c.bf16 %v1128, %v1126
        %1161 = vmatprep.subr.bf16.mxu0 %v1144
        %1162 = vmatpush1.bf16.xpose.msra.mxu0 %v1143
        %1163 = vmatprep.subr.bf16.mxu0 %v1142
        %1164 = vmatpush1.bf16.xpose.msra.mxu0 %v1141
        %1165 = vmatprep.subr.bf16.mxu0 %v1140
        %1166 = vmatpush1.bf16.xpose.msra.mxu0 %v1139
        %1167 = vmatprep.subr.bf16.mxu0 %v1138
        %1168 = vmatpush1.bf16.xpose.msra.mxu0 %v1137
        %1169 = vmatprep.subr.bf16.mxu0 %v1136
        %1170 = vmatpush1.bf16.xpose.msra.mxu0 %v1135
        %1171 = vmatprep.subr.bf16.mxu0 %v1134
        %1172 = vmatpush1.bf16.xpose.msra.mxu0 %v1133
        %1173 = vmatprep.subr.bf16.mxu0 %v1132
        %1174 = vmatpush1.bf16.xpose.msra.mxu0 %v1131
        %1175 = vmatprep.subr.bf16.mxu0 %v1130
        %1176 = vmatpush1.bf16.xpose.msra.mxu0 %v1129
        %1177 = vmatprep.subr.bf16.mxu0 %v1160
        %1178 = vmatpush2.bf16.xpose.msra.mxu0 %v1159
        %1179 = vmatprep.subr.bf16.mxu0 %v1158
        %1180 = vmatpush2.bf16.xpose.msra.mxu0 %v1157
        %1181 = vmatprep.subr.bf16.mxu0 %v1156
        %1182 = vmatpush2.bf16.xpose.msra.mxu0 %v1155
        %1183 = vmatprep.subr.bf16.mxu0 %v1154
        %1184 = vmatpush2.bf16.xpose.msra.mxu0 %v1153
        %1185 = vmatprep.subr.bf16.mxu0 %v1152
        %1186 = vmatpush2.bf16.xpose.msra.mxu0 %v1151
        %1187 = vmatprep.subr.bf16.mxu0 %v1150
        %1188 = vmatpush2.bf16.xpose.msra.mxu0 %v1149
        %1189 = vmatprep.subr.bf16.mxu0 %v1148
        %1190 = vmatpush2.bf16.xpose.msra.mxu0 %v1147
        %1191 = vmatprep.subr.bf16.mxu0 %v1146
        %1192 = vmatpush2.bf16.xpose.msra.mxu0 %v1145
        %1193 = vmatprep.mubr.bf16.mxu0 %v365
        %1194 = vmatmul.mubr.bf16.gmra.mxu0 %v364
        %v1195 = vpop.f32.mrf.mxu0
        %v1196 = vadd.f32 0.0, %v1195
        %v1197 = vpop.f32.mrf.mxu0
        %v1198 = vadd.f32 0.0, %v1197
        %v1199 = vpop.f32.mrf.mxu0
        %v1200 = vadd.f32 0.0, %v1199
        %v1201 = vpop.f32.mrf.mxu0
        %v1202 = vadd.f32 0.0, %v1201
        %1203 = vmatprep.mubr.bf16.mxu0 %v367
        %1204 = vmatmul.mubr.bf16.gmra.mxu0 %v366
        %v1205 = vpop.f32.mrf.mxu0
        %v1206 = vadd.f32 0.0, %v1205
        %v1207 = vpop.f32.mrf.mxu0
        %v1208 = vadd.f32 0.0, %v1207
        %v1209 = vpop.f32.mrf.mxu0
        %v1210 = vadd.f32 0.0, %v1209
        %v1211 = vpop.f32.mrf.mxu0
        %v1212 = vadd.f32 0.0, %v1211
        %1213 = vdwg.mxu0
        %s1214 = sld [smem:[#allocation2]]
        %v1215 = vstv %s1214
        %v1216 = vmul.f32 %v1215, %v1196
        %v1217 = vmul.f32 %v1215, %v1198
        %v1218 = vmul.f32 %v1215, %v1200
        %v1219 = vmul.f32 %v1215, %v1202
        %v1220 = vmul.f32 %v1215, %v1206
        %v1221 = vmul.f32 %v1215, %v1208
        %v1222 = vmul.f32 %v1215, %v1210
        %v1223 = vmul.f32 %v1215, %v1212
        %v1224 = vadd.f32 %v1216, %v218
        %v1225 = vadd.f32 %v1217, %v219
        %v1226 = vadd.f32 %v1218, %v220
        %v1227 = vadd.f32 %v1219, %v221
        %v1228 = vadd.f32 %v1220, %v222
        %v1229 = vadd.f32 %v1221, %v223
        %v1230 = vadd.f32 %v1222, %v224
        %v1231 = vadd.f32 %v1223, %v225
        %1232 = vst [vmem:[%s216] sm:$0xff] %v1224
        %1233 = vst [vmem:[%s216 + $0x8] sm:$0xff] %v1225
        %1234 = vst [vmem:[%s216 + $0x10] sm:$0xff] %v1226
        %1235 = vst [vmem:[%s216 + $0x18] sm:$0xff] %v1227
        %1236 = vst [vmem:[%s216 + $0x20] sm:$0xff] %v1228
        %1237 = vst [vmem:[%s216 + $0x28] sm:$0xff] %v1229
        %1238 = vst [vmem:[%s216 + $0x30] sm:$0xff] %v1230
        %1239 = vst [vmem:[%s216 + $0x38] sm:$0xff] %v1231
        %s1240 = sand.u32 %s119, 1
        %s1241 = scalar_lea.sflag [#allocation5], %s1240
        %s1242 = sand.u32 %s119, 1
        %s1243 = smul.addr %s1242, 64
        %s1244 = scalar_lea.vmem [#allocation6], %s1243
        // Predicated region
        $region41: #{tpu_custom_call.1} parent=35 // pred_check
          %p1245 = pneg %p129
        $region42: #{tpu_custom_call.1} parent=35 // pred_check_branch
          %1247 = sbr.rel (%p1245) target = $region44
        $region43: #{tpu_custom_call.1} parent=35 // pred_region
          %s1249 = ssub.s32 1024, 1024
          %1250 = vsyncadd %s1241, %s1249
          %s1251 = smul.addr %s22, 8
          %s1252 = smul.addr %s1251, 128
          %s1253 = scalar_lea.hbm %s4, %s1252
          %s1254 = sshll.u32 %s1244, 4
          %s1255 = int_to_ptr.vmem [resolvable:$true] %s1254
          %1260 = dma.vmem_to_hbm [thread:$0]  %s1255, 1024, %s1253, %s1241, 256, 256, 16
        $region44: #{tpu_custom_call.1} parent=35 // pred_fallthru
          _
      $region36: #{tpu_custom_call.1} parent=5 // pred_fallthru
        _
      %p1261 = scmp.le.s32.totalorder 2, %s17
      // Predicated region
      $region45: #{tpu_custom_call.1} parent=5 // pred_check
        %p1262 = pneg %p1261
      $region46: #{tpu_custom_call.1} parent=5 // pred_check_branch
        %1264 = sbr.rel (%p1262) target = $region48
      $region47: #{tpu_custom_call.1} parent=5 // pred_region
        %s1265 = ssub.s32 %s17, 2
        // Predicated region
        $region49: #{tpu_custom_call.1} parent=47 // pred_check
          %p1266 = pneg %p135
        $region50: #{tpu_custom_call.1} parent=47 // pred_check_branch
          %1268 = sbr.rel (%p1266) target = $region52
        $region51: #{tpu_custom_call.1} parent=47 // pred_region
          %s1269 = sand.u32 %s120, 1
          %s1270 = scalar_lea.sflag [#allocation5], %s1269
          %s1271 = sand.u32 %s120, 1
          %s1272 = smul.addr %s1271, 64
          %s1273 = scalar_lea.vmem [#allocation6], %s1272
          %1274 = dma.done %s1270, 1024
        $region52: #{tpu_custom_call.1} parent=47 // pred_fallthru
          _
      $region48: #{tpu_custom_call.1} parent=5 // pred_fallthru
        _
    $region6: #{tpu_custom_call.1} parent=1 // loop_footer
      %s21 = sadd.s32 1, %s17
    $region7: #{tpu_custom_call.1} parent=1 // loop_footer_branch
      %16 = sbr.rel target = $region3
    $region8: #{tpu_custom_call.1} parent=1 // loop_exit
      _
    %1275 = vsyncpa [#allocation4], 1
    %s1276 = scalar_lea.sflag [#allocation4], 1
    %1277 = vsyncpa %s1276, 1
    %1278 = vsyncpa [#allocation5], 1
    %s1279 = scalar_lea.sflag [#allocation5], 1
    %1280 = vsyncpa %s1279, 1

</llo_original>
